<compile_context>
chip_gen: v7x
topology: tpu7x:2x2x1
jax: 0.10.0
libtpu: 0.0.40
codegen_flags: <defaults>
</compile_context>

<pallas_src>
import functools
import math

import jax
import jax.numpy as jnp
from jax.experimental import pallas as pl
from jax.experimental.pallas import tpu as pltpu


# ----------------------------------------------------------------------------
# helpers
# ----------------------------------------------------------------------------
def _round_up(x, m):
    return ((x + m - 1) // m) * m


def _sigmoid(x):
    # Plain form; f32 here, overflow-safe for these magnitudes.
    return 1.0 / (1.0 + jnp.exp(-x))


def _vmem_capacity_bytes():
    """Per-core VMEM capacity; conservative 64 MiB fallback (v7x per-TC)."""
    try:
        info = pltpu.get_tpu_info()
        cap = getattr(info, "vmem_capacity_bytes", None)
        if cap:
            return int(cap)
    except Exception:
        pass
    return 64 * 1024 * 1024


def _choose_row_tile(N, LP, adj_bytes, out_bytes, budget):
    """Largest row tile (multiple of 8, divisor of N) fitting the VMEM budget.

    Accounts for: double-buffered adj tile (bf16), double-buffered XW block
    (f32), double-buffered output tile, plus fixed headroom.
    """
    if N % 8 != 0:
        return N                                  # full-extent block, always legal
    reserve = 2 * N * LP * 4 + (2 << 20)          # XW double-buffer + headroom
    avail = max(budget - reserve, 4 << 20)
    per_row = 2 * (N * adj_bytes + LP * out_bytes)  # dbl-buffered adj+out row
    tn = int(min(N, 1024, max(8, avail // per_row)))
    tn -= tn % 8
    for c in range(tn, 7, -8):
        if N % c == 0:
            return c
    return N


# ----------------------------------------------------------------------------
# Kernel 1 (tiny): GRU weight evolution + per-timestep projection.
#   grid = (T,), "arbitrary" (true recurrence); Q lives in VMEM scratch.
#   Emits XW[t] = features[t] @ Q_t, lane-padded to LP, in f32 (precision kept
#   so the adj @ XW accumulation stays within tight tolerance).
# ----------------------------------------------------------------------------
def evolve_project_kernel(q0_ref, w3_ref, u2_ref, uh_ref, b3_ref, feat_ref,
                          xw_ref, q_scr, *, lin_p):
    t = pl.program_id(0)

    @pl.when(t == 0)
    def _():
        q_scr[...] = q0_ref[...]

    Q = q_scr[...]                                            # (lin_p, LP)
    # Fused gate matmuls: [Wz;Wr;Wh] @ Q and [Uz;Ur] @ Q (3 MXU pushes, not 6).
    wq = jnp.dot(w3_ref[...], Q, preferred_element_type=jnp.float32)
    uq = jnp.dot(u2_ref[...], Q, preferred_element_type=jnp.float32)
    b = b3_ref[...]
    z = _sigmoid(wq[0:lin_p] + uq[0:lin_p] + b[0:lin_p])
    r = _sigmoid(wq[lin_p:2 * lin_p] + uq[lin_p:2 * lin_p] + b[lin_p:2 * lin_p])
    h = jnp.tanh(wq[2 * lin_p:3 * lin_p]
                 + jnp.dot(uh_ref[...], r * Q,
                           preferred_element_type=jnp.float32)
                 + b[2 * lin_p:3 * lin_p])
    q_new = (1.0 - z) * Q + z * h
    q_scr[...] = q_new
    xw_ref[...] = jnp.dot(feat_ref[...], q_new,
                          preferred_element_type=jnp.float32)


# ----------------------------------------------------------------------------
# Kernel 2 (big, HBM-bound): out[t] = relu(adj[t] @ XW[t]).
#   grid = (T, N // tn), both axes "parallel" (no cross-iteration state).
#   adj arrives as bf16 (exact for 0/1/2), upcast in-kernel; f32 accumulate;
#   bf16 lane-dense store.
# ----------------------------------------------------------------------------
def spmm_relu_kernel(xw_ref, adj_ref, out_ref):
    a = adj_ref[...].astype(jnp.float32)          # exact upcast of bf16 adj
    y = jnp.dot(a, xw_ref[...], preferred_element_type=jnp.float32)
    out_ref[...] = jnp.maximum(y, 0.0).astype(out_ref.dtype)


# ----------------------------------------------------------------------------
# GRCU forward.
# ----------------------------------------------------------------------------
def grcu_forward(adj_list, features_list, gcn_init_w, gru_params, *,
                 tn=None, adj_dtype=jnp.bfloat16, out_dtype=jnp.bfloat16):
    # bf16 adjacency is exact for {0,1,2}-valued adjacency (the spmm input
    # here); pass adj_dtype=jnp.float32 for pre-normalized float adjacency.
    # TODO(synk): on v7x only, fp8 (e4m3) adj would quarter the dominant read
    # stream; kept bf16 here for portability across v5e/v6e/v7x.
    adj = jnp.stack(adj_list).astype(adj_dtype)             # [T, N, N]
    feat = jnp.stack(features_list).astype(jnp.float32)     # [T, N, lin]
    T, N, _ = adj.shape
    lin, lout = gcn_init_w.shape

    lin_p = _round_up(lin, 8)                    # sublane-aligned gate rows
    LP = _round_up(max(lout, 128), 128)          # lane-dense output width

    # --- pad parameters (zero pads stay zero through the GRU recurrence) ----
    feat = jnp.pad(feat, ((0, 0), (0, 0), (0, lin_p - lin)))

    def pad_gate(w):                              # (lin, lin) -> (lin_p, lin_p)
        return jnp.pad(w, ((0, lin_p - lin), (0, lin_p - lin)))

    def pad_bias(b):                              # (lin, lout) -> (lin_p, LP)
        return jnp.pad(b, ((0, lin_p - lin), (0, LP - lout)))

    W3 = jnp.concatenate([pad_gate(gru_params[k]) for k in ("Wz", "Wr", "Wh")], 0)
    U2 = jnp.concatenate([pad_gate(gru_params[k]) for k in ("Uz", "Ur")], 0)
    Uh = pad_gate(gru_params["Uh"])
    b3 = jnp.concatenate([pad_bias(gru_params[k]) for k in ("bz", "br", "bh")], 0)
    Q0 = jnp.pad(gcn_init_w, ((0, lin_p - lin), (0, LP - lout)))

    # --- phase 1: evolve Q and project features (tiny, sequential in T) -----
    xw_seq = pl.pallas_call(
        functools.partial(evolve_project_kernel, lin_p=lin_p),
        out_shape=jax.ShapeDtypeStruct((T, N, LP), jnp.float32),
        grid=(T,),
        in_specs=[
            pl.BlockSpec((lin_p, LP), lambda t: (0, 0)),            # Q0 (padded)
            pl.BlockSpec((3 * lin_p, lin_p), lambda t: (0, 0)),     # [Wz;Wr;Wh]
            pl.BlockSpec((2 * lin_p, lin_p), lambda t: (0, 0)),     # [Uz;Ur]
            pl.BlockSpec((lin_p, lin_p), lambda t: (0, 0)),         # Uh
            pl.BlockSpec((3 * lin_p, LP), lambda t: (0, 0)),        # biases
            pl.BlockSpec((None, N, lin_p), lambda t: (t, 0, 0)),    # features[t]
        ],
        out_specs=pl.BlockSpec((None, N, LP), lambda t: (t, 0, 0)),
        scratch_shapes=[pltpu.VMEM((lin_p, LP), jnp.float32)],      # evolving Q
        compiler_params=pltpu.CompilerParams(
            dimension_semantics=("arbitrary",),   # true recurrence over t
        ),
    )(Q0, W3, U2, Uh, b3, feat)

    # --- phase 2: relu(adj[t] @ XW[t]) — HBM-bound, fully parallel grid -----
    adj_bytes = jnp.dtype(adj_dtype).itemsize
    out_bytes = jnp.dtype(out_dtype).itemsize
    cap = _vmem_capacity_bytes()
    if cap >= 100 * 1024 * 1024:                  # v5e / v6e: 128 MiB VMEM
        budget, vmem_limit = 96 << 20, 110 << 20
    else:                                         # v7x: 64 MiB per TC
        budget, vmem_limit = 44 << 20, 48 << 20
    if tn is None:
        tn = _choose_row_tile(N, LP, adj_bytes, out_bytes, budget)
    assert N % tn == 0

    out_pad = pl.pallas_call(
        spmm_relu_kernel,
        out_shape=jax.ShapeDtypeStruct((T, N, LP), out_dtype),
        grid=(T, N // tn),
        in_specs=[
            # XW block index depends only on t -> re-DMA'd only when t changes.
            pl.BlockSpec((None, N, LP), lambda t, i: (t, 0, 0)),
            pl.BlockSpec((None, tn, N), lambda t, i: (t, i, 0)),    # bf16 adj rows
        ],
        out_specs=pl.BlockSpec((None, tn, LP), lambda t, i: (t, i, 0)),
        compiler_params=pltpu.CompilerParams(
            # No cross-iteration state left in this kernel -> both axes can be
            # sharded across TensorCores (2x on v7x megacore).
            dimension_semantics=("parallel", "parallel"),
            vmem_limit_bytes=vmem_limit,
        ),
    )(xw_seq, adj)

    out = out_pad[..., :lout].astype(jnp.float32)   # drop lane pad, upcast
    return [out[t] for t in range(T)]


# ----------------------------------------------------------------------------
# Deterministic parameter init (mirrors the PyTorch __init__ shapes / inits).
# ----------------------------------------------------------------------------
def init_params(key, layer_in, layer_out):
    ks = jax.random.split(key, 7)
    stdv = 1.0 / math.sqrt(layer_in)              # mat_GRU_gate.reset_param

    def u(k, shape):
        return jax.random.uniform(k, shape, jnp.float32, -stdv, stdv)

    # nn.init.xavier_uniform_ on [layer_in, layer_out]
    bound = math.sqrt(6.0 / (layer_in + layer_out))
    gcn_w = jax.random.uniform(ks[0], (layer_in, layer_out), jnp.float32,
                               -bound, bound)
    zeros_b = jnp.zeros((layer_in, layer_out), jnp.float32)
    params = dict(
        Wz=u(ks[1], (layer_in, layer_in)), Uz=u(ks[2], (layer_in, layer_in)), bz=zeros_b,
        Wr=u(ks[3], (layer_in, layer_in)), Ur=u(ks[4], (layer_in, layer_in)), br=zeros_b,
        Wh=u(ks[5], (layer_in, layer_in)), Uh=u(ks[6], (layer_in, layer_in)), bh=zeros_b,
    )
    return gcn_w, params


# Pure-JAX reference for correctness checking.
def ref_forward(adj_list, feats_list, gcn_w, p):
    outs = []
    Q = gcn_w
    for adj, f in zip(adj_list, feats_list):
        z = jax.nn.sigmoid(p["Wz"] @ Q + p["Uz"] @ Q + p["bz"])
        r = jax.nn.sigmoid(p["Wr"] @ Q + p["Ur"] @ Q + p["br"])
        h = jnp.tanh(p["Wh"] @ Q + p["Uh"] @ (r * Q) + p["bh"])
        Q = (1.0 - z) * Q + z * h
        outs.append(jax.nn.relu(adj @ (f @ Q)))
    return outs


if __name__ == "__main__":
    N = 64          # nodes
    layer_in = 16   # input feature dim (== GRU "rows")
    layer_out = 8   # output feature dim (== GRU "cols")
    T = 3           # timesteps

    key = jax.random.PRNGKey(0)
    k_param, k_adj, k_feat = jax.random.split(key, 3)

    gcn_init_w, gru_params = init_params(k_param, layer_in, layer_out)

    adj_keys = jax.random.split(k_adj, T)
    feat_keys = jax.random.split(k_feat, T)
    adj_list, features_list = [], []
    for t in range(T):
        # sparse-ish symmetric adjacency with self-loops, stored dense
        a = (jax.random.uniform(adj_keys[t], (N, N)) > 0.9).astype(jnp.float32)
        a = jnp.maximum(a, a.T) + jnp.eye(N, dtype=jnp.float32)
        adj_list.append(a)
        features_list.append(
            jax.random.normal(feat_keys[t], (N, layer_in), jnp.float32))

    out_seq = grcu_forward(adj_list, features_list, gcn_init_w, gru_params)
    out_seq = [jax.block_until_ready(o) for o in out_seq]

    ref_seq = ref_forward(adj_list, features_list, gcn_init_w, gru_params)
    # Accumulation is f32 throughout (bf16 adj is exact for {0,1,2}); the only
    # lossy step is the final bf16 store (<= 2^-9 relative), hence tolerance.
    for o, r in zip(out_seq, ref_seq):
        assert o.shape == (N, layer_out)
        assert jnp.allclose(o, r, rtol=5e-3, atol=1e-2), "mismatch vs reference"

    print("KERNEL_OK")
</pallas_src>

<mosaic_0001>
module attributes {stable_mosaic.version = 11 : i64} {
  func.func @evolve_project_kernel(%arg0: i32, %arg1: memref<16x128xf32, #tpu.memory_space<vmem>>, %arg2: memref<48x16xf32, #tpu.memory_space<vmem>>, %arg3: memref<32x16xf32, #tpu.memory_space<vmem>>, %arg4: memref<16x16xf32, #tpu.memory_space<vmem>>, %arg5: memref<48x128xf32, #tpu.memory_space<vmem>>, %arg6: memref<1x64x16xf32, #tpu.memory_space<vmem>>, %arg7: memref<1x64x128xf32, #tpu.memory_space<vmem>>, %arg8: memref<16x128xf32, #tpu.memory_space<vmem>>) attributes {dimension_semantics = [#tpu.dimension_semantics<arbitrary>], iteration_bounds = array<i64: 3>, scalar_prefetch = 0 : i64, scratch_operands = 1 : i64, tpu.core_type = #tpu.core_type<tc>, window_params = [{pipeline_mode = #tpu.pipeline_mode<synchronous>, transform_indices = @transform_0, window_bounds = array<i64: 16, 128>}, {pipeline_mode = #tpu.pipeline_mode<synchronous>, transform_indices = @transform_1, window_bounds = array<i64: 48, 16>}, {pipeline_mode = #tpu.pipeline_mode<synchronous>, transform_indices = @transform_2, window_bounds = array<i64: 32, 16>}, {pipeline_mode = #tpu.pipeline_mode<synchronous>, transform_indices = @transform_3, window_bounds = array<i64: 16, 16>}, {pipeline_mode = #tpu.pipeline_mode<synchronous>, transform_indices = @transform_4, window_bounds = array<i64: 48, 128>}, {transform_indices = @transform_5, window_bounds = array<i64: 1, 64, 16>}, {transform_indices = @transform_6, window_bounds = array<i64: 1, 64, 128>}]} {
    %c0_i32 = arith.constant 0 : i32
    %0 = arith.cmpi eq, %arg0, %c0_i32 : i32
    %1 = arith.extui %0 : i1 to i32
    %c0_i32_0 = arith.constant 0 : i32
    %2 = arith.cmpi ne, %1, %c0_i32_0 : i32
    scf.if %2 {
      %c0_28 = arith.constant 0 : index
      %c0_29 = arith.constant 0 : index
      %53 = vector.load %arg1[%c0_28, %c0_29] : memref<16x128xf32, #tpu.memory_space<vmem>>, vector<16x128xf32>
      %c0_30 = arith.constant 0 : index
      %c0_31 = arith.constant 0 : index
      %54 = vector.load %arg8[%c0_30, %c0_31] : memref<16x128xf32, #tpu.memory_space<vmem>>, vector<16x128xf32>
      tpu.vector_store %arg8[%c0_30, %c0_31], %53 {strides = array<i32>} : memref<16x128xf32, #tpu.memory_space<vmem>>, vector<16x128xf32>,
    } else {
    }
    %c0 = arith.constant 0 : index
    %c0_1 = arith.constant 0 : index
    %3 = vector.load %arg8[%c0, %c0_1] : memref<16x128xf32, #tpu.memory_space<vmem>>, vector<16x128xf32>
    %c0_2 = arith.constant 0 : index
    %c0_3 = arith.constant 0 : index
    %4 = vector.load %arg2[%c0_2, %c0_3] : memref<48x16xf32, #tpu.memory_space<vmem>>, vector<48x16xf32>
    %cst = arith.constant dense<0.000000e+00> : vector<48x128xf32>
    %5 = tpu.matmul %4, %3, %cst {dimension_numbers = #tpu.dot_dimension_numbers<[1], [0], [0], [1], [0, 0, 1, 1], [], []>} : vector<48x16xf32>, vector<16x128xf32>, vector<48x128xf32> -> vector<48x128xf32>
    %c0_4 = arith.constant 0 : index
    %c0_5 = arith.constant 0 : index
    %6 = vector.load %arg3[%c0_4, %c0_5] : memref<32x16xf32, #tpu.memory_space<vmem>>, vector<32x16xf32>
    %cst_6 = arith.constant dense<0.000000e+00> : vector<32x128xf32>
    %7 = tpu.matmul %6, %3, %cst_6 {dimension_numbers = #tpu.dot_dimension_numbers<[1], [0], [0], [1], [0, 0, 1, 1], [], []>} : vector<32x16xf32>, vector<16x128xf32>, vector<32x128xf32> -> vector<32x128xf32>
    %c0_7 = arith.constant 0 : index
    %c0_8 = arith.constant 0 : index
    %8 = vector.load %arg5[%c0_7, %c0_8] : memref<48x128xf32, #tpu.memory_space<vmem>>, vector<48x128xf32>
    %9 = vector.extract_strided_slice %5 {offsets = [0, 0], sizes = [16, 128], strides = [1, 1]} : vector<48x128xf32> to vector<16x128xf32>
    %10 = vector.extract_strided_slice %7 {offsets = [0, 0], sizes = [16, 128], strides = [1, 1]} : vector<32x128xf32> to vector<16x128xf32>
    %11 = arith.addf %9, %10 : vector<16x128xf32>
    %12 = vector.extract_strided_slice %8 {offsets = [0, 0], sizes = [16, 128], strides = [1, 1]} : vector<48x128xf32> to vector<16x128xf32>
    %13 = arith.addf %11, %12 : vector<16x128xf32>
    %cst_9 = arith.constant 0.000000e+00 : f32
    %14 = vector.broadcast %cst_9 : f32 to vector<16x128xf32>
    %15 = arith.subf %14, %13 : vector<16x128xf32>
    %16 = math.exp %15 : vector<16x128xf32>
    %cst_10 = arith.constant 1.000000e+00 : f32
    %17 = vector.broadcast %cst_10 : f32 to vector<16x128xf32>
    %18 = arith.addf %17, %16 : vector<16x128xf32>
    %cst_11 = arith.constant 1.000000e+00 : f32
    %19 = vector.broadcast %cst_11 : f32 to vector<16x128xf32>
    %20 = arith.divf %19, %18 : vector<16x128xf32>
    %21 = vector.extract_strided_slice %5 {offsets = [16, 0], sizes = [16, 128], strides = [1, 1]} : vector<48x128xf32> to vector<16x128xf32>
    %22 = vector.extract_strided_slice %7 {offsets = [16, 0], sizes = [16, 128], strides = [1, 1]} : vector<32x128xf32> to vector<16x128xf32>
    %23 = arith.addf %21, %22 : vector<16x128xf32>
    %24 = vector.extract_strided_slice %8 {offsets = [16, 0], sizes = [16, 128], strides = [1, 1]} : vector<48x128xf32> to vector<16x128xf32>
    %25 = arith.addf %23, %24 : vector<16x128xf32>
    %cst_12 = arith.constant 0.000000e+00 : f32
    %26 = vector.broadcast %cst_12 : f32 to vector<16x128xf32>
    %27 = arith.subf %26, %25 : vector<16x128xf32>
    %28 = math.exp %27 : vector<16x128xf32>
    %cst_13 = arith.constant 1.000000e+00 : f32
    %29 = vector.broadcast %cst_13 : f32 to vector<16x128xf32>
    %30 = arith.addf %29, %28 : vector<16x128xf32>
    %cst_14 = arith.constant 1.000000e+00 : f32
    %31 = vector.broadcast %cst_14 : f32 to vector<16x128xf32>
    %32 = arith.divf %31, %30 : vector<16x128xf32>
    %33 = vector.extract_strided_slice %5 {offsets = [32, 0], sizes = [16, 128], strides = [1, 1]} : vector<48x128xf32> to vector<16x128xf32>
    %c0_15 = arith.constant 0 : index
    %c0_16 = arith.constant 0 : index
    %34 = vector.load %arg4[%c0_15, %c0_16] : memref<16x16xf32, #tpu.memory_space<vmem>>, vector<16x16xf32>
    %35 = arith.mulf %32, %3 : vector<16x128xf32>
    %cst_17 = arith.constant dense<0.000000e+00> : vector<16x128xf32>
    %36 = tpu.matmul %34, %35, %cst_17 {dimension_numbers = #tpu.dot_dimension_numbers<[1], [0], [0], [1], [0, 0, 1, 1], [], []>} : vector<16x16xf32>, vector<16x128xf32>, vector<16x128xf32> -> vector<16x128xf32>
    %37 = arith.addf %33, %36 : vector<16x128xf32>
    %38 = vector.extract_strided_slice %8 {offsets = [32, 0], sizes = [16, 128], strides = [1, 1]} : vector<48x128xf32> to vector<16x128xf32>
    %39 = arith.addf %37, %38 : vector<16x128xf32>
    %40 = math.tanh %39 : vector<16x128xf32>
    %cst_18 = arith.constant 1.000000e+00 : f32
    %41 = vector.broadcast %cst_18 : f32 to vector<16x128xf32>
    %42 = arith.subf %41, %20 : vector<16x128xf32>
    %43 = arith.mulf %42, %3 : vector<16x128xf32>
    %44 = arith.mulf %20, %40 : vector<16x128xf32>
    %45 = arith.addf %43, %44 : vector<16x128xf32>
    %c0_19 = arith.constant 0 : index
    %c0_20 = arith.constant 0 : index
    %46 = vector.load %arg8[%c0_19, %c0_20] : memref<16x128xf32, #tpu.memory_space<vmem>>, vector<16x128xf32>
    tpu.vector_store %arg8[%c0_19, %c0_20], %45 {strides = array<i32>} : memref<16x128xf32, #tpu.memory_space<vmem>>, vector<16x128xf32>,
    %c0_21 = arith.constant 0 : index
    %c0_22 = arith.constant 0 : index
    %c0_23 = arith.constant 0 : index
    %47 = vector.load %arg6[%c0_21, %c0_22, %c0_23] : memref<1x64x16xf32, #tpu.memory_space<vmem>>, vector<1x64x16xf32>
    %48 = vector.shape_cast %47 : vector<1x64x16xf32> to vector<64x16xf32>
    %cst_24 = arith.constant dense<0.000000e+00> : vector<64x128xf32>
    %49 = tpu.matmul %48, %45, %cst_24 {dimension_numbers = #tpu.dot_dimension_numbers<[1], [0], [0], [1], [0, 0, 1, 1], [], []>} : vector<64x16xf32>, vector<16x128xf32>, vector<64x128xf32> -> vector<64x128xf32>
    %c0_25 = arith.constant 0 : index
    %c0_26 = arith.constant 0 : index
    %c0_27 = arith.constant 0 : index
    %50 = vector.load %arg7[%c0_25, %c0_26, %c0_27] : memref<1x64x128xf32, #tpu.memory_space<vmem>>, vector<1x64x128xf32>
    %51 = vector.shape_cast %50 : vector<1x64x128xf32> to vector<64x128xf32>
    %52 = vector.shape_cast %49 : vector<64x128xf32> to vector<1x64x128xf32>
    tpu.vector_store %arg7[%c0_25, %c0_26, %c0_27], %52 {strides = array<i32>} : memref<1x64x128xf32, #tpu.memory_space<vmem>>, vector<1x64x128xf32>,
    return
  }
  func.func @transform_0(%arg0: i32) -> (i32, i32) {
    %c0_i32 = arith.constant 0 : i32
    %c0_i32_0 = arith.constant 0 : i32
    %c0_i32_1 = arith.constant 0 : i32
    return %c0_i32, %c0_i32_0 : i32, i32
  }
  func.func @transform_1(%arg0: i32) -> (i32, i32) {
    %c0_i32 = arith.constant 0 : i32
    %c0_i32_0 = arith.constant 0 : i32
    %c0_i32_1 = arith.constant 0 : i32
    return %c0_i32, %c0_i32_0 : i32, i32
  }
  func.func @transform_2(%arg0: i32) -> (i32, i32) {
    %c0_i32 = arith.constant 0 : i32
    %c0_i32_0 = arith.constant 0 : i32
    %c0_i32_1 = arith.constant 0 : i32
    return %c0_i32, %c0_i32_0 : i32, i32
  }
  func.func @transform_3(%arg0: i32) -> (i32, i32) {
    %c0_i32 = arith.constant 0 : i32
    %c0_i32_0 = arith.constant 0 : i32
    %c0_i32_1 = arith.constant 0 : i32
    return %c0_i32, %c0_i32_0 : i32, i32
  }
  func.func @transform_4(%arg0: i32) -> (i32, i32) {
    %c0_i32 = arith.constant 0 : i32
    %c0_i32_0 = arith.constant 0 : i32
    %c0_i32_1 = arith.constant 0 : i32
    return %c0_i32, %c0_i32_0 : i32, i32
  }
  func.func @transform_5(%arg0: i32) -> (i32, i32, i32) {
    %c0_i32 = arith.constant 0 : i32
    %c0_i32_0 = arith.constant 0 : i32
    %c0_i32_1 = arith.constant 0 : i32
    return %arg0, %c0_i32, %c0_i32_0 : i32, i32, i32
  }
  func.func @transform_6(%arg0: i32) -> (i32, i32, i32) {
    %c0_i32 = arith.constant 0 : i32
    %c0_i32_0 = arith.constant 0 : i32
    %c0_i32_1 = arith.constant 0 : i32
    return %arg0, %c0_i32, %c0_i32_0 : i32, i32, i32
  }
}

</mosaic_0001>

<llo_original>
// kernel: tpu_custom_call.1
$region0: #{tpu_custom_call.1}
  #allocation0 [shape = 'u32[]', space=smem, size = 0x4, offset = 0x4, fixed_abs, tag = 'smem constant byte address 0x4 - core index']
  #allocation1 [shape = 'u32[144,128]{1,0:T(1,128)}', space=vmem, size = 0x12000, scoped, tag = 'internal scratch']
  #allocation2 [shape = 'f32[16,128]{1,0:T(8,128)}', space=vmem, size = 0x2000, scoped, tag = 'scratch operand']
  %s0 = inlined_call_operand.vmem [shape: f32[16,128], index: 0, kind: input, shape index: {}]
  %s1 = inlined_call_operand.vmem [shape: f32[48,16], index: 1, kind: input, shape index: {}]
  %s2 = inlined_call_operand.vmem [shape: f32[32,16], index: 2, kind: input, shape index: {}]
  %s3 = inlined_call_operand.vmem [shape: f32[16,16], index: 3, kind: input, shape index: {}]
  %s4 = inlined_call_operand.vmem [shape: f32[48,128], index: 4, kind: input, shape index: {}]
  %s5 = inlined_call_operand.vmem [shape: f32[3,64,16], index: 5, kind: input, shape index: {}]
  %s6 = inlined_call_operand.hbm [shape: f32[3,64,128], index: 6, kind: output, shape index: {}]
  %s7 = sld [smem:[#allocation0]]
  $region61: #{tpu_custom_call.1} parent=0
    _
  %s9 = ssub.s32 1, %s7
  %s10 = scalar_select 0, %s9, %s7
  $region1: #{tpu_custom_call.1} parent=0
    #allocation3 [shape = 'u8[65536]{0}', space=vmem, size = 0x10000, scoped, tag = 'output window, operand 0']
    #allocation4 [shape = 's32[2]{0}', space=sflag, size = 0x8, scoped, tag = 'scoped memory for tpu_custom_call.1']
    %11 = vsyncpa [#allocation4], 0
    %s12 = scalar_lea.sflag [#allocation4], 1
    %13 = vsyncpa %s12, 0
    loop: start=0, step=1, limit=5
    $region2: #{tpu_custom_call.1} parent=1 // loop_pre_header
      _
    $region3: #{tpu_custom_call.1} parent=1 // loop_header
      %s15 = sphi 0, %s19
      %p16 = scmp.ge.s32.totalorder %s15, 5
      %s23 = sphi 0, %s23
      %s25 = sphi 0, %s23
      %s26 = sphi 0, %s25
      %s40 = sphi 0, %s26
      %s44 = sphi 0, %s44
      %s46 = sphi 0, %s44
      %s47 = sphi 0, %s46
      %s61 = sphi 0, %s47
      %s65 = sphi 0, %s65
      %s67 = sphi 0, %s65
      %s68 = sphi 0, %s67
      %s82 = sphi 0, %s68
      %s86 = sphi 0, %s86
      %s88 = sphi 0, %s86
      %s89 = sphi 0, %s88
      %s103 = sphi 0, %s89
      %s107 = sphi 0, %s107
      %s109 = sphi 0, %s107
      %s110 = sphi 0, %s109
      %s124 = sphi 0, %s110
      %s130 = sphi 0, %s132
      %s133 = sphi 0, %s130
      %s134 = sphi 0, %s133
      %s150 = sphi 0, %s134
      %s156 = sphi 0, %s158
      %s159 = sphi 0, %s156
      %s160 = sphi 0, %s159
      %s176 = sphi 0, %s160
    $region4: #{tpu_custom_call.1} parent=1 // loop_header_branch
      %18 = sbr.rel (%p16) target = $region8
    $region5: #{tpu_custom_call.1} parent=1 // loop_body
      %s20 = ssub.s32 %s15, 1
      %s21 = ssub.s32 %s15, 2
      %s22 = sadd.s32 %s15, 1
      %s24 = sadd.s32 %s23, 1
      %p27 = scmp.eq.s32.totalorder %s15, 2
      %p28 = scmp.ne.s32.totalorder %s23, %s25
      %p29 = scmp.eq.s32.totalorder %s15, 0
      %p30 = por %p28, %p29
      %p31 = scmp.ne.s32.totalorder %s23, %s25
      %p32 = scmp.eq.s32.totalorder %s20, 2
      %p33 = por %p31, %p32
      %p34 = scmp.ne.s32.totalorder %s25, %s26
      %p35 = scmp.eq.s32.totalorder %s20, 0
      %p36 = por %p34, %p35
      %p37 = scmp.ne.s32.totalorder %s25, %s26
      %p38 = scmp.eq.s32.totalorder %s21, 2
      %p39 = por %p37, %p38
      %p41 = scmp.ne.s32.totalorder %s26, %s40
      %p42 = scmp.eq.s32.totalorder %s21, 0
      %p43 = por %p41, %p42
      %s45 = sadd.s32 %s44, 1
      %p48 = scmp.eq.s32.totalorder %s15, 2
      %p49 = scmp.ne.s32.totalorder %s44, %s46
      %p50 = scmp.eq.s32.totalorder %s15, 0
      %p51 = por %p49, %p50
      %p52 = scmp.ne.s32.totalorder %s44, %s46
      %p53 = scmp.eq.s32.totalorder %s20, 2
      %p54 = por %p52, %p53
      %p55 = scmp.ne.s32.totalorder %s46, %s47
      %p56 = scmp.eq.s32.totalorder %s20, 0
      %p57 = por %p55, %p56
      %p58 = scmp.ne.s32.totalorder %s46, %s47
      %p59 = scmp.eq.s32.totalorder %s21, 2
      %p60 = por %p58, %p59
      %p62 = scmp.ne.s32.totalorder %s47, %s61
      %p63 = scmp.eq.s32.totalorder %s21, 0
      %p64 = por %p62, %p63
      %s66 = sadd.s32 %s65, 1
      %p69 = scmp.eq.s32.totalorder %s15, 2
      %p70 = scmp.ne.s32.totalorder %s65, %s67
      %p71 = scmp.eq.s32.totalorder %s15, 0
      %p72 = por %p70, %p71
      %p73 = scmp.ne.s32.totalorder %s65, %s67
      %p74 = scmp.eq.s32.totalorder %s20, 2
      %p75 = por %p73, %p74
      %p76 = scmp.ne.s32.totalorder %s67, %s68
      %p77 = scmp.eq.s32.totalorder %s20, 0
      %p78 = por %p76, %p77
      %p79 = scmp.ne.s32.totalorder %s67, %s68
      %p80 = scmp.eq.s32.totalorder %s21, 2
      %p81 = por %p79, %p80
      %p83 = scmp.ne.s32.totalorder %s68, %s82
      %p84 = scmp.eq.s32.totalorder %s21, 0
      %p85 = por %p83, %p84
      %s87 = sadd.s32 %s86, 1
      %p90 = scmp.eq.s32.totalorder %s15, 2
      %p91 = scmp.ne.s32.totalorder %s86, %s88
      %p92 = scmp.eq.s32.totalorder %s15, 0
      %p93 = por %p91, %p92
      %p94 = scmp.ne.s32.totalorder %s86, %s88
      %p95 = scmp.eq.s32.totalorder %s20, 2
      %p96 = por %p94, %p95
      %p97 = scmp.ne.s32.totalorder %s88, %s89
      %p98 = scmp.eq.s32.totalorder %s20, 0
      %p99 = por %p97, %p98
      %p100 = scmp.ne.s32.totalorder %s88, %s89
      %p101 = scmp.eq.s32.totalorder %s21, 2
      %p102 = por %p100, %p101
      %p104 = scmp.ne.s32.totalorder %s89, %s103
      %p105 = scmp.eq.s32.totalorder %s21, 0
      %p106 = por %p104, %p105
      %s108 = sadd.s32 %s107, 1
      %p111 = scmp.eq.s32.totalorder %s15, 2
      %p112 = scmp.ne.s32.totalorder %s107, %s109
      %p113 = scmp.eq.s32.totalorder %s15, 0
      %p114 = por %p112, %p113
      %p115 = scmp.ne.s32.totalorder %s107, %s109
      %p116 = scmp.eq.s32.totalorder %s20, 2
      %p117 = por %p115, %p116
      %p118 = scmp.ne.s32.totalorder %s109, %s110
      %p119 = scmp.eq.s32.totalorder %s20, 0
      %p120 = por %p118, %p119
      %p121 = scmp.ne.s32.totalorder %s109, %s110
      %p122 = scmp.eq.s32.totalorder %s21, 2
      %p123 = por %p121, %p122
      %p125 = scmp.ne.s32.totalorder %s110, %s124
      %p126 = scmp.eq.s32.totalorder %s21, 0
      %p127 = por %p125, %p126
      %s128 = ssub.s32 %s15, %s22
      %p129 = scmp.eq.s32.totalorder %s128, 0
      %s131 = sadd.s32 %s130, 1
      %s132 = scalar_select %p129, %s130, %s131
      %p135 = pneg %p129
      %p136 = scmp.eq.s32.totalorder %s15, 2
      %p137 = por %p135, %p136
      %p138 = scmp.ne.s32.totalorder %s130, %s133
      %p139 = scmp.eq.s32.totalorder %s15, 0
      %p140 = por %p138, %p139
      %p141 = scmp.ne.s32.totalorder %s130, %s133
      %p142 = scmp.eq.s32.totalorder %s20, 2
      %p143 = por %p141, %p142
      %p144 = scmp.ne.s32.totalorder %s133, %s134
      %p145 = scmp.eq.s32.totalorder %s20, 0
      %p146 = por %p144, %p145
      %p147 = scmp.ne.s32.totalorder %s133, %s134
      %p148 = scmp.eq.s32.totalorder %s21, 2
      %p149 = por %p147, %p148
      %p151 = scmp.ne.s32.totalorder %s134, %s150
      %p152 = scmp.eq.s32.totalorder %s21, 0
      %p153 = por %p151, %p152
      %s154 = ssub.s32 %s15, %s22
      %p155 = scmp.eq.s32.totalorder %s154, 0
      %s157 = sadd.s32 %s156, 1
      %s158 = scalar_select %p155, %s156, %s157
      %p161 = pneg %p155
      %p162 = scmp.eq.s32.totalorder %s15, 2
      %p163 = por %p161, %p162
      %p164 = scmp.ne.s32.totalorder %s156, %s159
      %p165 = scmp.eq.s32.totalorder %s15, 0
      %p166 = por %p164, %p165
      %p167 = scmp.ne.s32.totalorder %s156, %s159
      %p168 = scmp.eq.s32.totalorder %s20, 2
      %p169 = por %p167, %p168
      %p170 = scmp.ne.s32.totalorder %s159, %s160
      %p171 = scmp.eq.s32.totalorder %s20, 0
      %p172 = por %p170, %p171
      %p173 = scmp.ne.s32.totalorder %s159, %s160
      %p174 = scmp.eq.s32.totalorder %s21, 2
      %p175 = por %p173, %p174
      %p177 = scmp.ne.s32.totalorder %s160, %s176
      %p178 = scmp.eq.s32.totalorder %s21, 0
      %p179 = por %p177, %p178
      %p180 = scmp.le.s32.totalorder 1, %s15
      %p181 = scmp.lt.s32.totalorder %s15, 4
      %p182 = pnand %p180, %p181
      %p183 = pneg %p182
      // Predicated region
      $region9: #{tpu_custom_call.1} parent=5 // pred_check
        _
      $region10: #{tpu_custom_call.1} parent=5 // pred_check_branch
        %185 = sbr.rel (%p182) target = $region12
      $region11: #{tpu_custom_call.1} parent=5 // pred_region
        %s186 = ssub.s32 %s15, 1
        // Predicated region
        $region13: #{tpu_custom_call.1} parent=11 // pred_check
          %p187 = pneg %p36
        $region14: #{tpu_custom_call.1} parent=11 // pred_check_branch
          %189 = sbr.rel (%p187) target = $region16
        $region15: #{tpu_custom_call.1} parent=11 // pred_region
          _
        $region16: #{tpu_custom_call.1} parent=11 // pred_fallthru
          _
        // Predicated region
        $region17: #{tpu_custom_call.1} parent=11 // pred_check
          %p190 = pneg %p57
        $region18: #{tpu_custom_call.1} parent=11 // pred_check_branch
          %192 = sbr.rel (%p190) target = $region20
        $region19: #{tpu_custom_call.1} parent=11 // pred_region
          _
        $region20: #{tpu_custom_call.1} parent=11 // pred_fallthru
          _
        // Predicated region
        $region21: #{tpu_custom_call.1} parent=11 // pred_check
          %p193 = pneg %p78
        $region22: #{tpu_custom_call.1} parent=11 // pred_check_branch
          %195 = sbr.rel (%p193) target = $region24
        $region23: #{tpu_custom_call.1} parent=11 // pred_region
          _
        $region24: #{tpu_custom_call.1} parent=11 // pred_fallthru
          _
        // Predicated region
        $region25: #{tpu_custom_call.1} parent=11 // pred_check
          %p196 = pneg %p99
        $region26: #{tpu_custom_call.1} parent=11 // pred_check_branch
          %198 = sbr.rel (%p196) target = $region28
        $region27: #{tpu_custom_call.1} parent=11 // pred_region
          _
        $region28: #{tpu_custom_call.1} parent=11 // pred_fallthru
          _
        // Predicated region
        $region29: #{tpu_custom_call.1} parent=11 // pred_check
          %p199 = pneg %p120
        $region30: #{tpu_custom_call.1} parent=11 // pred_check_branch
          %201 = sbr.rel (%p199) target = $region32
        $region31: #{tpu_custom_call.1} parent=11 // pred_region
          _
        $region32: #{tpu_custom_call.1} parent=11 // pred_fallthru
          _
      $region12: #{tpu_custom_call.1} parent=5 // pred_fallthru
        _
      %p202 = scmp.lt.s32.totalorder %s15, 3
      // Predicated region
      $region33: #{tpu_custom_call.1} parent=5 // pred_check
        %p203 = pneg %p202
      $region34: #{tpu_custom_call.1} parent=5 // pred_check_branch
        %205 = sbr.rel (%p203) target = $region36
      $region35: #{tpu_custom_call.1} parent=5 // pred_region
        // Predicated region
        $region37: #{tpu_custom_call.1} parent=35 // pred_check
          %p206 = pneg %p140
        $region38: #{tpu_custom_call.1} parent=35 // pred_check_branch
          %208 = sbr.rel (%p206) target = $region40
        $region39: #{tpu_custom_call.1} parent=35 // pred_region
          %p209 = scmp.lt.s32.totalorder %s15, 2
          %s210 = scalar_select %p209, %s15, 2
          %s211 = smul.addr %s210, 8
          %s212 = smul.addr %s211, 8
          %s213 = scalar_lea.vmem %s5, %s212
        $region40: #{tpu_custom_call.1} parent=35 // pred_fallthru
          _
      $region36: #{tpu_custom_call.1} parent=5 // pred_fallthru
        _
      %p214 = scmp.le.s32.totalorder 1, %s15
      %p215 = scmp.lt.s32.totalorder %s15, 4
      %p216 = pnand %p214, %p215
      %p217 = pneg %p216
      // Predicated region
      $region41: #{tpu_custom_call.1} parent=5 // pred_check
        _
      $region42: #{tpu_custom_call.1} parent=5 // pred_check_branch
        %219 = sbr.rel (%p216) target = $region44
      $region43: #{tpu_custom_call.1} parent=5 // pred_region
        %s220 = ssub.s32 %s15, 1
        %p221 = pneg %p36
        %p222 = pneg %p33
        %p223 = pneg %p57
        %p224 = pneg %p54
        %p225 = pneg %p78
        %p226 = pneg %p75
        %p227 = pneg %p99
        %p228 = pneg %p96
        %p229 = pneg %p120
        %p230 = pneg %p117
        %p231 = scmp.lt.s32.totalorder %s20, 2
        %s232 = scalar_select %p231, %s20, 2
        %s233 = smul.addr %s232, 8
        %s234 = smul.addr %s233, 8
        %s235 = scalar_lea.vmem %s5, %s234
        %p236 = pneg %p146
        %p237 = pneg %p143
        %p238 = pneg %p172
        %p239 = pneg %p169
        %s240 = sand.u32 %s159, 1
        %s241 = scalar_lea.sflag [#allocation4], %s240
        %s242 = sand.u32 %s159, 1
        %s243 = smul.addr %s242, 64
        %s244 = scalar_lea.vmem [#allocation3], %s243
        %p245 = scmp.lt.s32.totalorder %s20, 2
        %s246 = scalar_select %p245, %s20, 2
        %s247 = smul.addr %s246, 8
        %s248 = smul.addr %s247, 8
        %s249 = scalar_lea.vmem %s5, %s248
        %p250 = scmp.eq.s32.totalorder %s20, 0
        // Predicated region
        $region45: #{tpu_custom_call.1} parent=43 // pred_check
          %p251 = pneg %p250
        $region46: #{tpu_custom_call.1} parent=43 // pred_check_branch
          %253 = sbr.rel (%p251) target = $region48
        $region47: #{tpu_custom_call.1} parent=43 // pred_region
          %v254 = vld [vmem:[%s0] sm:$0xff]
          %v255 = vld [vmem:[%s0 + $0x8] sm:$0xff]
          %256 = vst [vmem:[#allocation2] sm:$0xff] %v254
          %257 = vst [vmem:[#allocation2 + $0x8] sm:$0xff] %v255
        $region48: #{tpu_custom_call.1} parent=43 // pred_fallthru
          _
        %v258 = vld [vmem:[#allocation2] sm:$0xff]
        %v259 = vld [vmem:[#allocation2 + $0x8] sm:$0xff]
        %v260 = vld [vmem:[%s1] sm:$0xff]
        %v261 = vld [vmem:[%s1 + $0x8] sm:$0xff]
        %v262 = vld [vmem:[%s1 + $0x10] sm:$0xff]
        %v263 = vld [vmem:[%s1 + $0x18] sm:$0xff]
        %v264 = vld [vmem:[%s1 + $0x20] sm:$0xff]
        %v265 = vld [vmem:[%s1 + $0x28] sm:$0xff]
        %vm266 = vcmask 130048
        %v268 = vsel %vm266, %v260, 0
        %v271 = vsel %vm266, %v261, 0
        %v274 = vsel %vm266, %v262, 0
        %v277 = vsel %vm266, %v263, 0
        %v280 = vsel %vm266, %v264, 0
        %v283 = vsel %vm266, %v265, 0
        %285 = vmatprep.subr.mxu0 0.0
        %286 = vmatpush1.msra.mxu0 %v258
        %287 = vmatprep.subr.mxu0 0.0
        %288 = vmatpush1.msra.mxu0 %v259
        %289 = vmatprep.subr.mxu0 0.0
        %290 = vmatpush1.msra.mxu0 0.0
        %291 = vmatprep.subr.mxu0 0.0
        %292 = vmatpush1.msra.mxu0 0.0
        %293 = vmatprep.subr.mxu0 0.0
        %294 = vmatpush1.msra.mxu0 0.0
        %295 = vmatprep.subr.mxu0 0.0
        %296 = vmatpush1.msra.mxu0 0.0
        %297 = vmatprep.subr.mxu0 0.0
        %298 = vmatpush1.msra.mxu0 0.0
        %299 = vmatprep.subr.mxu0 0.0
        %300 = vmatpush1.msra.mxu0 0.0
        %301 = vmatprep.subr.mxu0 0.0
        %302 = vmatpush1.msra.mxu0 0.0
        %303 = vmatprep.subr.mxu0 0.0
        %304 = vmatpush1.msra.mxu0 0.0
        %305 = vmatprep.subr.mxu0 0.0
        %306 = vmatpush1.msra.mxu0 0.0
        %307 = vmatprep.subr.mxu0 0.0
        %308 = vmatpush1.msra.mxu0 0.0
        %309 = vmatprep.subr.mxu0 0.0
        %310 = vmatpush1.msra.mxu0 0.0
        %311 = vmatprep.subr.mxu0 0.0
        %312 = vmatpush1.msra.mxu0 0.0
        %313 = vmatprep.subr.mxu0 0.0
        %314 = vmatpush1.msra.mxu0 0.0
        %315 = vmatprep.subr.mxu0 0.0
        %316 = vmatpush1.msra.mxu0 0.0
        %317 = vmatprep.subr.mxu0 0.0
        %318 = vmatpush1.msra.mxu0 0.0
        %319 = vmatprep.subr.mxu0 0.0
        %320 = vmatpush1.msra.mxu0 0.0
        %321 = vmatprep.subr.mxu0 0.0
        %322 = vmatpush1.msra.mxu0 0.0
        %323 = vmatprep.subr.mxu0 0.0
        %324 = vmatpush1.msra.mxu0 0.0
        %325 = vmatprep.subr.mxu0 0.0
        %326 = vmatpush1.msra.mxu0 0.0
        %327 = vmatprep.subr.mxu0 0.0
        %328 = vmatpush1.msra.mxu0 0.0
        %329 = vmatprep.subr.mxu0 0.0
        %330 = vmatpush1.msra.mxu0 0.0
        %331 = vmatprep.subr.mxu0 0.0
        %332 = vmatpush1.msra.mxu0 0.0
        %333 = vmatprep.subr.mxu0 0.0
        %334 = vmatpush1.msra.mxu0 0.0
        %335 = vmatprep.subr.mxu0 0.0
        %336 = vmatpush1.msra.mxu0 0.0
        %337 = vmatprep.subr.mxu0 0.0
        %338 = vmatpush1.msra.mxu0 0.0
        %339 = vmatprep.subr.mxu0 0.0
        %340 = vmatpush1.msra.mxu0 0.0
        %341 = vmatprep.subr.mxu0 0.0
        %342 = vmatpush1.msra.mxu0 0.0
        %343 = vmatprep.subr.mxu0 0.0
        %344 = vmatpush1.msra.mxu0 0.0
        %345 = vmatprep.subr.mxu0 0.0
        %346 = vmatpush1.msra.mxu0 0.0
        %347 = vmatprep.subr.mxu0 0.0
        %348 = vmatpush1.msra.mxu0 0.0
        %349 = vmatprep.mubr.f32.mxu0 0.0
        %350 = vmatmul.mubr.f32.gmra.mrb[0].mxu0 %v268
        %v351 = vpop.f32.mrb[0].mxu0
        %v352 = vadd.f32 0.0, %v351
        %v353 = vpop.f32.mrb[0].mxu0
        %354 = vmatprep.mubr.f32.mxu0 0.0
        %355 = vmatmul.mubr.f32.gmra.mrb[0].mxu0 %v271
        %v356 = vpop.f32.mrb[0].mxu0
        %v357 = vadd.f32 0.0, %v356
        %v358 = vpop.f32.mrb[0].mxu0
        %359 = vmatprep.mubr.f32.mxu0 0.0
        %360 = vmatmul.mubr.f32.gmra.mrb[0].mxu0 %v274
        %v361 = vpop.f32.mrb[0].mxu0
        %v362 = vadd.f32 0.0, %v361
        %v363 = vpop.f32.mrb[0].mxu0
        %364 = vmatprep.mubr.f32.mxu0 0.0
        %365 = vmatmul.mubr.f32.gmra.mrb[0].mxu0 %v277
        %v366 = vpop.f32.mrb[0].mxu0
        %v367 = vadd.f32 0.0, %v366
        %v368 = vpop.f32.mrb[0].mxu0
        %369 = vmatprep.mubr.f32.mxu0 0.0
        %370 = vmatmul.mubr.f32.gmra.mrb[0].mxu0 %v280
        %v371 = vpop.f32.mrb[0].mxu0
        %v372 = vadd.f32 0.0, %v371
        %v373 = vpop.f32.mrb[0].mxu0
        %374 = vmatprep.mubr.f32.mxu0 0.0
        %375 = vmatmul.mubr.f32.gmra.mrb[0].mxu0 %v283
        %v376 = vpop.f32.mrb[0].mxu0
        %v377 = vadd.f32 0.0, %v376
        %v378 = vpop.f32.mrb[0].mxu0
        %379 = vdwg.mxu0
        %v380 = vld [vmem:[%s2] sm:$0xff]
        %v381 = vld [vmem:[%s2 + $0x8] sm:$0xff]
        %v382 = vld [vmem:[%s2 + $0x10] sm:$0xff]
        %v383 = vld [vmem:[%s2 + $0x18] sm:$0xff]
        %v385 = vsel %vm266, %v380, 0
        %v388 = vsel %vm266, %v381, 0
        %v391 = vsel %vm266, %v382, 0
        %v394 = vsel %vm266, %v383, 0
        %396 = vmatprep.subr.mxu0 0.0
        %397 = vmatpush1.msra.mxu0 %v258
        %398 = vmatprep.subr.mxu0 0.0
        %399 = vmatpush1.msra.mxu0 %v259
        %400 = vmatprep.subr.mxu0 0.0
        %401 = vmatpush1.msra.mxu0 0.0
        %402 = vmatprep.subr.mxu0 0.0
        %403 = vmatpush1.msra.mxu0 0.0
        %404 = vmatprep.subr.mxu0 0.0
        %405 = vmatpush1.msra.mxu0 0.0
        %406 = vmatprep.subr.mxu0 0.0
        %407 = vmatpush1.msra.mxu0 0.0
        %408 = vmatprep.subr.mxu0 0.0
        %409 = vmatpush1.msra.mxu0 0.0
        %410 = vmatprep.subr.mxu0 0.0
        %411 = vmatpush1.msra.mxu0 0.0
        %412 = vmatprep.subr.mxu0 0.0
        %413 = vmatpush1.msra.mxu0 0.0
        %414 = vmatprep.subr.mxu0 0.0
        %415 = vmatpush1.msra.mxu0 0.0
        %416 = vmatprep.subr.mxu0 0.0
        %417 = vmatpush1.msra.mxu0 0.0
        %418 = vmatprep.subr.mxu0 0.0
        %419 = vmatpush1.msra.mxu0 0.0
        %420 = vmatprep.subr.mxu0 0.0
        %421 = vmatpush1.msra.mxu0 0.0
        %422 = vmatprep.subr.mxu0 0.0
        %423 = vmatpush1.msra.mxu0 0.0
        %424 = vmatprep.subr.mxu0 0.0
        %425 = vmatpush1.msra.mxu0 0.0
        %426 = vmatprep.subr.mxu0 0.0
        %427 = vmatpush1.msra.mxu0 0.0
        %428 = vmatprep.subr.mxu0 0.0
        %429 = vmatpush1.msra.mxu0 0.0
        %430 = vmatprep.subr.mxu0 0.0
        %431 = vmatpush1.msra.mxu0 0.0
        %432 = vmatprep.subr.mxu0 0.0
        %433 = vmatpush1.msra.mxu0 0.0
        %434 = vmatprep.subr.mxu0 0.0
        %435 = vmatpush1.msra.mxu0 0.0
        %436 = vmatprep.subr.mxu0 0.0
        %437 = vmatpush1.msra.mxu0 0.0
        %438 = vmatprep.subr.mxu0 0.0
        %439 = vmatpush1.msra.mxu0 0.0
        %440 = vmatprep.subr.mxu0 0.0
        %441 = vmatpush1.msra.mxu0 0.0
        %442 = vmatprep.subr.mxu0 0.0
        %443 = vmatpush1.msra.mxu0 0.0
        %444 = vmatprep.subr.mxu0 0.0
        %445 = vmatpush1.msra.mxu0 0.0
        %446 = vmatprep.subr.mxu0 0.0
        %447 = vmatpush1.msra.mxu0 0.0
        %448 = vmatprep.subr.mxu0 0.0
        %449 = vmatpush1.msra.mxu0 0.0
        %450 = vmatprep.subr.mxu0 0.0
        %451 = vmatpush1.msra.mxu0 0.0
        %452 = vmatprep.subr.mxu0 0.0
        %453 = vmatpush1.msra.mxu0 0.0
        %454 = vmatprep.subr.mxu0 0.0
        %455 = vmatpush1.msra.mxu0 0.0
        %456 = vmatprep.subr.mxu0 0.0
        %457 = vmatpush1.msra.mxu0 0.0
        %458 = vmatprep.subr.mxu0 0.0
        %459 = vmatpush1.msra.mxu0 0.0
        %460 = vmatprep.mubr.f32.mxu0 0.0
        %461 = vmatmul.mubr.f32.gmra.mrb[0].mxu0 %v385
        %v462 = vpop.f32.mrb[0].mxu0
        %v463 = vadd.f32 0.0, %v462
        %v464 = vpop.f32.mrb[0].mxu0
        %465 = vmatprep.mubr.f32.mxu0 0.0
        %466 = vmatmul.mubr.f32.gmra.mrb[0].mxu0 %v388
        %v467 = vpop.f32.mrb[0].mxu0
        %v468 = vadd.f32 0.0, %v467
        %v469 = vpop.f32.mrb[0].mxu0
        %470 = vmatprep.mubr.f32.mxu0 0.0
        %471 = vmatmul.mubr.f32.gmra.mrb[0].mxu0 %v391
        %v472 = vpop.f32.mrb[0].mxu0
        %v473 = vadd.f32 0.0, %v472
        %v474 = vpop.f32.mrb[0].mxu0
        %475 = vmatprep.mubr.f32.mxu0 0.0
        %476 = vmatmul.mubr.f32.gmra.mrb[0].mxu0 %v394
        %v477 = vpop.f32.mrb[0].mxu0
        %v478 = vadd.f32 0.0, %v477
        %v479 = vpop.f32.mrb[0].mxu0
        %480 = vdwg.mxu0
        %v481 = vld [vmem:[%s4] sm:$0xff]
        %v482 = vld [vmem:[%s4 + $0x8] sm:$0xff]
        %v483 = vld [vmem:[%s4 + $0x10] sm:$0xff]
        %v484 = vld [vmem:[%s4 + $0x18] sm:$0xff]
        %v485 = vld [vmem:[%s4 + $0x20] sm:$0xff]
        %v486 = vld [vmem:[%s4 + $0x28] sm:$0xff]
        %v487 = vadd.f32 %v352, %v463
        %v488 = vadd.f32 %v357, %v468
        %v489 = vadd.f32 %v487, %v481
        %v490 = vadd.f32 %v488, %v482
        %v491 = vsub.f32 0.0, %v489
        %v492 = vsub.f32 0.0, %v490
        %v493 = vmul.f32 %v491, 1.442695
        %v494 = vpow.pop %v493
        %v495 = vmul.f32 %v492, 1.442695
        %v496 = vpow.pop %v495
        %v497 = vadd.f32 %v494, 1.0
        %v498 = vadd.f32 %v496, 1.0
        %v499 = vrcp.pop %v497
        %v500 = vmul.f32 1.0, %v499
        %v501 = vrcp.pop %v498
        %v502 = vmul.f32 1.0, %v501
        %v503 = vadd.f32 %v362, %v473
        %v504 = vadd.f32 %v367, %v478
        %v505 = vadd.f32 %v503, %v483
        %v506 = vadd.f32 %v504, %v484
        %v507 = vsub.f32 0.0, %v505
        %v508 = vsub.f32 0.0, %v506
        %v509 = vmul.f32 %v507, 1.442695
        %v510 = vpow.pop %v509
        %v511 = vmul.f32 %v508, 1.442695
        %v512 = vpow.pop %v511
        %v513 = vadd.f32 %v510, 1.0
        %v514 = vadd.f32 %v512, 1.0
        %v515 = vrcp.pop %v513
        %v516 = vmul.f32 1.0, %v515
        %v517 = vrcp.pop %v514
        %v518 = vmul.f32 1.0, %v517
        %v519 = vld [vmem:[%s3] sm:$0xff]
        %v520 = vld [vmem:[%s3 + $0x8] sm:$0xff]
        %v521 = vmul.f32 %v516, %v258
        %v522 = vmul.f32 %v518, %v259
        %v524 = vsel %vm266, %v519, 0
        %v527 = vsel %vm266, %v520, 0
        %529 = vmatprep.subr.mxu0 0.0
        %530 = vmatpush1.msra.mxu0 %v521
        %531 = vmatprep.subr.mxu0 0.0
        %532 = vmatpush1.msra.mxu0 %v522
        %533 = vmatprep.subr.mxu0 0.0
        %534 = vmatpush1.msra.mxu0 0.0
        %535 = vmatprep.subr.mxu0 0.0
        %536 = vmatpush1.msra.mxu0 0.0
        %537 = vmatprep.subr.mxu0 0.0
        %538 = vmatpush1.msra.mxu0 0.0
        %539 = vmatprep.subr.mxu0 0.0
        %540 = vmatpush1.msra.mxu0 0.0
        %541 = vmatprep.subr.mxu0 0.0
        %542 = vmatpush1.msra.mxu0 0.0
        %543 = vmatprep.subr.mxu0 0.0
        %544 = vmatpush1.msra.mxu0 0.0
        %545 = vmatprep.subr.mxu0 0.0
        %546 = vmatpush1.msra.mxu0 0.0
        %547 = vmatprep.subr.mxu0 0.0
        %548 = vmatpush1.msra.mxu0 0.0
        %549 = vmatprep.subr.mxu0 0.0
        %550 = vmatpush1.msra.mxu0 0.0
        %551 = vmatprep.subr.mxu0 0.0
        %552 = vmatpush1.msra.mxu0 0.0
        %553 = vmatprep.subr.mxu0 0.0
        %554 = vmatpush1.msra.mxu0 0.0
        %555 = vmatprep.subr.mxu0 0.0
        %556 = vmatpush1.msra.mxu0 0.0
        %557 = vmatprep.subr.mxu0 0.0
        %558 = vmatpush1.msra.mxu0 0.0
        %559 = vmatprep.subr.mxu0 0.0
        %560 = vmatpush1.msra.mxu0 0.0
        %561 = vmatprep.subr.mxu0 0.0
        %562 = vmatpush1.msra.mxu0 0.0
        %563 = vmatprep.subr.mxu0 0.0
        %564 = vmatpush1.msra.mxu0 0.0
        %565 = vmatprep.subr.mxu0 0.0
        %566 = vmatpush1.msra.mxu0 0.0
        %567 = vmatprep.subr.mxu0 0.0
        %568 = vmatpush1.msra.mxu0 0.0
        %569 = vmatprep.subr.mxu0 0.0
        %570 = vmatpush1.msra.mxu0 0.0
        %571 = vmatprep.subr.mxu0 0.0
        %572 = vmatpush1.msra.mxu0 0.0
        %573 = vmatprep.subr.mxu0 0.0
        %574 = vmatpush1.msra.mxu0 0.0
        %575 = vmatprep.subr.mxu0 0.0
        %576 = vmatpush1.msra.mxu0 0.0
        %577 = vmatprep.subr.mxu0 0.0
        %578 = vmatpush1.msra.mxu0 0.0
        %579 = vmatprep.subr.mxu0 0.0
        %580 = vmatpush1.msra.mxu0 0.0
        %581 = vmatprep.subr.mxu0 0.0
        %582 = vmatpush1.msra.mxu0 0.0
        %583 = vmatprep.subr.mxu0 0.0
        %584 = vmatpush1.msra.mxu0 0.0
        %585 = vmatprep.subr.mxu0 0.0
        %586 = vmatpush1.msra.mxu0 0.0
        %587 = vmatprep.subr.mxu0 0.0
        %588 = vmatpush1.msra.mxu0 0.0
        %589 = vmatprep.subr.mxu0 0.0
        %590 = vmatpush1.msra.mxu0 0.0
        %591 = vmatprep.subr.mxu0 0.0
        %592 = vmatpush1.msra.mxu0 0.0
        %593 = vmatprep.mubr.f32.mxu0 0.0
        %594 = vmatmul.mubr.f32.gmra.mrb[0].mxu0 %v524
        %v595 = vpop.f32.mrb[0].mxu0
        %v596 = vadd.f32 0.0, %v595
        %v597 = vpop.f32.mrb[0].mxu0
        %598 = vmatprep.mubr.f32.mxu0 0.0
        %599 = vmatmul.mubr.f32.gmra.mrb[0].mxu0 %v527
        %v600 = vpop.f32.mrb[0].mxu0
        %v601 = vadd.f32 0.0, %v600
        %v602 = vpop.f32.mrb[0].mxu0
        %603 = vdwg.mxu0
        %v604 = vadd.f32 %v372, %v596
        %v605 = vadd.f32 %v377, %v601
        %v606 = vadd.f32 %v604, %v485
        %v607 = vadd.f32 %v605, %v486
        %v608 = vtanh.pop %v606
        %v609 = vtanh.pop %v607
        %v610 = vsub.f32 1.0, %v500
        %v611 = vsub.f32 1.0, %v502
        %v612 = vmul.f32 %v610, %v258
        %v613 = vmul.f32 %v611, %v259
        %v614 = vmul.f32 %v500, %v608
        %v615 = vmul.f32 %v502, %v609
        %v616 = vadd.f32 %v612, %v614
        %v617 = vadd.f32 %v613, %v615
        %618 = vst [vmem:[#allocation2] sm:$0xff] %v616
        %619 = vst [vmem:[#allocation2 + $0x8] sm:$0xff] %v617
        %v620 = vld [vmem:[%s249] sm:$0xff]
        %v621 = vld [vmem:[%s249 + $0x8] sm:$0xff]
        %v622 = vld [vmem:[%s249 + $0x10] sm:$0xff]
        %v623 = vld [vmem:[%s249 + $0x18] sm:$0xff]
        %v624 = vld [vmem:[%s249 + $0x20] sm:$0xff]
        %v625 = vld [vmem:[%s249 + $0x28] sm:$0xff]
        %v626 = vld [vmem:[%s249 + $0x30] sm:$0xff]
        %v627 = vld [vmem:[%s249 + $0x38] sm:$0xff]
        %v629 = vsel %vm266, %v620, 0
        %v632 = vsel %vm266, %v621, 0
        %v635 = vsel %vm266, %v622, 0
        %v638 = vsel %vm266, %v623, 0
        %v641 = vsel %vm266, %v624, 0
        %v644 = vsel %vm266, %v625, 0
        %v647 = vsel %vm266, %v626, 0
        %v650 = vsel %vm266, %v627, 0
        %652 = vmatprep.subr.mxu0 0.0
        %653 = vmatpush1.msra.mxu0 %v616
        %654 = vmatprep.subr.mxu0 0.0
        %655 = vmatpush1.msra.mxu0 %v617
        %656 = vmatprep.subr.mxu0 0.0
        %657 = vmatpush1.msra.mxu0 0.0
        %658 = vmatprep.subr.mxu0 0.0
        %659 = vmatpush1.msra.mxu0 0.0
        %660 = vmatprep.subr.mxu0 0.0
        %661 = vmatpush1.msra.mxu0 0.0
        %662 = vmatprep.subr.mxu0 0.0
        %663 = vmatpush1.msra.mxu0 0.0
        %664 = vmatprep.subr.mxu0 0.0
        %665 = vmatpush1.msra.mxu0 0.0
        %666 = vmatprep.subr.mxu0 0.0
        %667 = vmatpush1.msra.mxu0 0.0
        %668 = vmatprep.subr.mxu0 0.0
        %669 = vmatpush1.msra.mxu0 0.0
        %670 = vmatprep.subr.mxu0 0.0
        %671 = vmatpush1.msra.mxu0 0.0
        %672 = vmatprep.subr.mxu0 0.0
        %673 = vmatpush1.msra.mxu0 0.0
        %674 = vmatprep.subr.mxu0 0.0
        %675 = vmatpush1.msra.mxu0 0.0
        %676 = vmatprep.subr.mxu0 0.0
        %677 = vmatpush1.msra.mxu0 0.0
        %678 = vmatprep.subr.mxu0 0.0
        %679 = vmatpush1.msra.mxu0 0.0
        %680 = vmatprep.subr.mxu0 0.0
        %681 = vmatpush1.msra.mxu0 0.0
        %682 = vmatprep.subr.mxu0 0.0
        %683 = vmatpush1.msra.mxu0 0.0
        %684 = vmatprep.subr.mxu0 0.0
        %685 = vmatpush1.msra.mxu0 0.0
        %686 = vmatprep.subr.mxu0 0.0
        %687 = vmatpush1.msra.mxu0 0.0
        %688 = vmatprep.subr.mxu0 0.0
        %689 = vmatpush1.msra.mxu0 0.0
        %690 = vmatprep.subr.mxu0 0.0
        %691 = vmatpush1.msra.mxu0 0.0
        %692 = vmatprep.subr.mxu0 0.0
        %693 = vmatpush1.msra.mxu0 0.0
        %694 = vmatprep.subr.mxu0 0.0
        %695 = vmatpush1.msra.mxu0 0.0
        %696 = vmatprep.subr.mxu0 0.0
        %697 = vmatpush1.msra.mxu0 0.0
        %698 = vmatprep.subr.mxu0 0.0
        %699 = vmatpush1.msra.mxu0 0.0
        %700 = vmatprep.subr.mxu0 0.0
        %701 = vmatpush1.msra.mxu0 0.0
        %702 = vmatprep.subr.mxu0 0.0
        %703 = vmatpush1.msra.mxu0 0.0
        %704 = vmatprep.subr.mxu0 0.0
        %705 = vmatpush1.msra.mxu0 0.0
        %706 = vmatprep.subr.mxu0 0.0
        %707 = vmatpush1.msra.mxu0 0.0
        %708 = vmatprep.subr.mxu0 0.0
        %709 = vmatpush1.msra.mxu0 0.0
        %710 = vmatprep.subr.mxu0 0.0
        %711 = vmatpush1.msra.mxu0 0.0
        %712 = vmatprep.subr.mxu0 0.0
        %713 = vmatpush1.msra.mxu0 0.0
        %714 = vmatprep.subr.mxu0 0.0
        %715 = vmatpush1.msra.mxu0 0.0
        %716 = vmatprep.mubr.f32.mxu0 0.0
        %717 = vmatmul.mubr.f32.gmra.mrb[0].mxu0 %v629
        %v718 = vpop.f32.mrb[0].mxu0
        %v719 = vadd.f32 0.0, %v718
        %v720 = vpop.f32.mrb[0].mxu0
        %721 = vmatprep.mubr.f32.mxu0 0.0
        %722 = vmatmul.mubr.f32.gmra.mrb[0].mxu0 %v632
        %v723 = vpop.f32.mrb[0].mxu0
        %v724 = vadd.f32 0.0, %v723
        %v725 = vpop.f32.mrb[0].mxu0
        %726 = vmatprep.mubr.f32.mxu0 0.0
        %727 = vmatmul.mubr.f32.gmra.mrb[0].mxu0 %v635
        %v728 = vpop.f32.mrb[0].mxu0
        %v729 = vadd.f32 0.0, %v728
        %v730 = vpop.f32.mrb[0].mxu0
        %731 = vmatprep.mubr.f32.mxu0 0.0
        %732 = vmatmul.mubr.f32.gmra.mrb[0].mxu0 %v638
        %v733 = vpop.f32.mrb[0].mxu0
        %v734 = vadd.f32 0.0, %v733
        %v735 = vpop.f32.mrb[0].mxu0
        %736 = vmatprep.mubr.f32.mxu0 0.0
        %737 = vmatmul.mubr.f32.gmra.mrb[0].mxu0 %v641
        %v738 = vpop.f32.mrb[0].mxu0
        %v739 = vadd.f32 0.0, %v738
        %v740 = vpop.f32.mrb[0].mxu0
        %741 = vmatprep.mubr.f32.mxu0 0.0
        %742 = vmatmul.mubr.f32.gmra.mrb[0].mxu0 %v644
        %v743 = vpop.f32.mrb[0].mxu0
        %v744 = vadd.f32 0.0, %v743
        %v745 = vpop.f32.mrb[0].mxu0
        %746 = vmatprep.mubr.f32.mxu0 0.0
        %747 = vmatmul.mubr.f32.gmra.mrb[0].mxu0 %v647
        %v748 = vpop.f32.mrb[0].mxu0
        %v749 = vadd.f32 0.0, %v748
        %v750 = vpop.f32.mrb[0].mxu0
        %751 = vmatprep.mubr.f32.mxu0 0.0
        %752 = vmatmul.mubr.f32.gmra.mrb[0].mxu0 %v650
        %v753 = vpop.f32.mrb[0].mxu0
        %v754 = vadd.f32 0.0, %v753
        %v755 = vpop.f32.mrb[0].mxu0
        %756 = vdwg.mxu0
        %757 = vst [vmem:[%s244] sm:$0xff] %v719
        %758 = vst [vmem:[%s244 + $0x8] sm:$0xff] %v724
        %759 = vst [vmem:[%s244 + $0x10] sm:$0xff] %v729
        %760 = vst [vmem:[%s244 + $0x18] sm:$0xff] %v734
        %761 = vst [vmem:[%s244 + $0x20] sm:$0xff] %v739
        %762 = vst [vmem:[%s244 + $0x28] sm:$0xff] %v744
        %763 = vst [vmem:[%s244 + $0x30] sm:$0xff] %v749
        %764 = vst [vmem:[%s244 + $0x38] sm:$0xff] %v754
        %s765 = sand.u32 %s159, 1
        %s766 = scalar_lea.sflag [#allocation4], %s765
        %s767 = sand.u32 %s159, 1
        %s768 = smul.addr %s767, 64
        %s769 = scalar_lea.vmem [#allocation3], %s768
        // Predicated region
        $region49: #{tpu_custom_call.1} parent=43 // pred_check
          %p770 = pneg %p169
        $region50: #{tpu_custom_call.1} parent=43 // pred_check_branch
          %772 = sbr.rel (%p770) target = $region52
        $region51: #{tpu_custom_call.1} parent=43 // pred_region
          %s774 = ssub.s32 1024, 1024
          %775 = vsyncadd %s766, %s774
          %s776 = smul.addr %s20, 8
          %s777 = smul.addr %s776, 128
          %s778 = scalar_lea.hbm %s6, %s777
          %s779 = sshll.u32 %s769, 4
          %s780 = int_to_ptr.vmem [resolvable:$true] %s779
          %785 = dma.vmem_to_hbm [thread:$0]  %s780, 1024, %s778, %s766, 128, 128, 8
        $region52: #{tpu_custom_call.1} parent=43 // pred_fallthru
          _
      $region44: #{tpu_custom_call.1} parent=5 // pred_fallthru
        _
      %p786 = scmp.le.s32.totalorder 2, %s15
      // Predicated region
      $region53: #{tpu_custom_call.1} parent=5 // pred_check
        %p787 = pneg %p786
      $region54: #{tpu_custom_call.1} parent=5 // pred_check_branch
        %789 = sbr.rel (%p787) target = $region56
      $region55: #{tpu_custom_call.1} parent=5 // pred_region
        %s790 = ssub.s32 %s15, 2
        // Predicated region
        $region57: #{tpu_custom_call.1} parent=55 // pred_check
          %p791 = pneg %p175
        $region58: #{tpu_custom_call.1} parent=55 // pred_check_branch
          %793 = sbr.rel (%p791) target = $region60
        $region59: #{tpu_custom_call.1} parent=55 // pred_region
          %s794 = sand.u32 %s160, 1
          %s795 = scalar_lea.sflag [#allocation4], %s794
          %s796 = sand.u32 %s160, 1
          %s797 = smul.addr %s796, 64
          %s798 = scalar_lea.vmem [#allocation3], %s797
          %799 = dma.done %s795, 1024
        $region60: #{tpu_custom_call.1} parent=55 // pred_fallthru
          _
      $region56: #{tpu_custom_call.1} parent=5 // pred_fallthru
        _
    $region6: #{tpu_custom_call.1} parent=1 // loop_footer
      %s19 = sadd.s32 1, %s15
    $region7: #{tpu_custom_call.1} parent=1 // loop_footer_branch
      %14 = sbr.rel target = $region3
    $region8: #{tpu_custom_call.1} parent=1 // loop_exit
      _
    %800 = vsyncpa [#allocation4], 1
    %s801 = scalar_lea.sflag [#allocation4], 1
    %802 = vsyncpa %s801, 1

</llo_original>
